<compile_context>
chip_gen: v7x
topology: tpu7x:2x2x1
jax: 0.10.0
libtpu: 0.0.40
codegen_flags: <defaults>
</compile_context>

<pallas_src>
import math

import jax
import jax.numpy as jnp
from jax import lax
from jax.experimental import pallas as pl
from jax.experimental.pallas import tpu as pltpu

LANE = 128
_BN_EPS = 1e-5


def _round_up(n, m):
    return ((n + m - 1) // m) * m


def _tpu_kind():
    try:
        return jax.devices()[0].device_kind.lower()
    except Exception:
        return ""


def _default_compute_dtype():
    # bf16 MXU operands on bf16-native generations (v6e / v7x); keep f32 on
    # v5e/older (no bf16 VALU -> extra conversion passes) and unknown backends.
    kind = _tpu_kind()
    if any(tag in kind for tag in ("v6", "6e", "v7", "7x", "tpu7")):
        return jnp.bfloat16
    return jnp.float32


def _vmem_budget_bytes():
    cap = 0
    try:
        info = pltpu.get_tpu_info()
        cap = int(getattr(info, "vmem_capacity_bytes", 0) or 0)
    except Exception:
        cap = 0
    if cap <= 0:
        kind = _tpu_kind()
        cap = (64 << 20) if ("7" in kind) else (128 << 20)
    # ~80% of physical: headroom for Mosaic internal scratch / in-out buffers.
    return max(int(0.80 * cap), 16 << 20)


def _pick_tile(batch, target, step):
    best = None
    t = step
    while t <= min(int(target), int(batch)):
        if batch % t == 0:
            best = t
        t += step
    return best


# ----------------------------------------------------------------------------
# Kernels
# ----------------------------------------------------------------------------
def _make_fused_kernel(n_layers, has_deep_ctx, ctx_slices, compute_dtype):
    """Whole-problem-in-VMEM kernel (also reused, squeezed, by forward_stacked).

    Ref order: x, [ctx, W_ctx_all], W_0..W_{L}, b_out, (gamma_i, beta_i)*, out.
    """
    n_hidden = n_layers - 1

    def kernel(*refs):
        out_ref = refs[-1]
        it = iter(refs[:-1])
        x_ref = next(it)
        ctx_ref = next(it) if has_deep_ctx else None
        wc_ref = next(it) if has_deep_ctx else None
        wh_refs = [next(it) for _ in range(n_layers)]
        b_ref = next(it)                                  # final-layer bias only
        bn_refs = [(next(it), next(it)) for _ in range(n_hidden)]

        inv_b = jnp.float32(1.0 / x_ref.shape[0])

        if has_deep_ctx:
            # One fused skinny matmul shared by every deep-injected layer.
            ctx_all = jnp.dot(ctx_ref[...].astype(compute_dtype), wc_ref[...],
                              preferred_element_type=jnp.float32)

        h = x_ref[...].astype(compute_dtype)              # layer-0 input = [x | ctx]
        for i in range(n_layers):
            pre = jnp.dot(h, wh_refs[i][...], preferred_element_type=jnp.float32)
            if has_deep_ctx and i >= 1:
                pre = pre + ctx_all[:, ctx_slices[i]]     # broadcasts if ctx is (1, C)
            if i < n_layers - 1:
                gamma_ref, beta_ref = bn_refs[i]
                # BatchNorm1d training mode, two-pass (mean then centered var) for
                # better precision than E[x^2]-E[x]^2.  Hidden biases omitted:
                # exactly cancelled by the mean subtraction.
                mean = jnp.sum(pre, axis=0, keepdims=True) * inv_b
                d = pre - mean
                var = jnp.sum(d * d, axis=0, keepdims=True) * inv_b
                scale = gamma_ref[...] * lax.rsqrt(var + _BN_EPS)   # gamma=0 on padding
                h = jnp.maximum(d * scale + beta_ref[...], 0.0).astype(compute_dtype)
            else:
                out_ref[...] = (pre + b_ref[...]).astype(out_ref.dtype)

    return kernel


def _make_tiled_kernel(bn_input, add_ctx, emit_stats, compute_dtype):
    """One layer of the batch-tiled path.

    Ref order: in, [scale, shift], [ctx, W_ctx], W, [b], out, [stats].
    If emit_stats: writes pre-activations + per-tile sum / sum-sq partials.
    If bn_input:  applies the previous layer's folded BN scale/shift + ReLU first.
    """

    def kernel(*refs):
        it = iter(refs)
        in_ref = next(it)
        scale_ref = shift_ref = None
        if bn_input:
            scale_ref = next(it)
            shift_ref = next(it)
        ctx_ref = wc_ref = None
        if add_ctx:
            ctx_ref = next(it)
            wc_ref = next(it)
        w_ref = next(it)
        b_ref = None if emit_stats else next(it)
        out_ref = next(it)
        stats_ref = next(it) if emit_stats else None

        if bn_input:
            pre_in = in_ref[...].astype(jnp.float32)
            h = jnp.maximum(pre_in * scale_ref[...] + shift_ref[...], 0.0)
            h = h.astype(compute_dtype)
        else:
            h = in_ref[...].astype(compute_dtype)

        pre = jnp.dot(h, w_ref[...], preferred_element_type=jnp.float32)
        if add_ctx:
            pre = pre + jnp.dot(ctx_ref[...].astype(compute_dtype), wc_ref[...],
                                preferred_element_type=jnp.float32)

        if emit_stats:
            out_ref[...] = pre
            s1 = jnp.sum(pre, axis=0, keepdims=True)
            s2 = jnp.sum(pre * pre, axis=0, keepdims=True)
            pad = jnp.zeros((6, pre.shape[1]), jnp.float32)
            stats_ref[...] = jnp.concatenate([s1, s2, pad], axis=0)
        else:
            out_ref[...] = (pre + b_ref[...]).astype(out_ref.dtype)

    return kernel


# ----------------------------------------------------------------------------
# Module wrapper
# ----------------------------------------------------------------------------
class ConditionalDenseNNPallas:
    """Pallas TPU implementation of scvi's ConditionalDenseNN forward (2-D inputs)."""

    def __init__(self, input_dim, hidden_dims, output_dims=(1,), context_dim=0,
                 deep_context_injection=False, compute_dtype=None,
                 key=jax.random.PRNGKey(42)):
        self.input_dim = int(input_dim)
        self.hidden_dims = tuple(int(d) for d in hidden_dims)
        self.output_dims = tuple(int(d) for d in output_dims)
        self.context_dim = int(context_dim)
        self.deep_context_injection = bool(deep_context_injection)
        self.compute_dtype = (_default_compute_dtype() if compute_dtype is None
                              else compute_dtype)
        cd = self.compute_dtype

        self.n_output_layers = len(self.output_dims)
        self.output_total_dim = sum(self.output_dims)
        self.output_slices = []
        start = 0
        for d in self.output_dims:
            self.output_slices.append(slice(start, start + d))
            start += d

        self.n_hidden = len(self.hidden_dims)
        self.n_layers = self.n_hidden + 1
        self.has_ctx = self.context_dim > 0
        self.inject_ctx = [self.has_ctx and (self.deep_context_injection or i == 0)
                           for i in range(self.n_layers)]
        # layer-0 context is folded into the first matmul's K dim; only deep
        # injection into layers >= 1 needs a separate context matmul.
        self.has_deep_ctx = (self.has_ctx and self.deep_context_injection
                             and self.n_layers > 1)

        if self.hidden_dims:
            in_dims = (self.input_dim,) + self.hidden_dims
            out_dims = self.hidden_dims + (self.output_total_dim,)
        else:
            in_dims = (self.input_dim,)
            out_dims = (self.output_total_dim,)
        # lane-pad every layer output to a multiple of 128 (unmasked stores / clean K)
        self.out_pads = tuple(_round_up(d, LANE) for d in out_dims)
        self.in_pads = (self.input_dim,) + self.out_pads[:-1]
        self.layer0_k = self.input_dim + (self.context_dim if self.inject_ctx[0] else 0)

        # ---- deterministic parameter init.  Unpadded copies feed the pure-JAX
        # reference; padded (compute_dtype) copies feed the kernels. ----
        keys = jax.random.split(key, 2 * self.n_layers)
        self.ref_layers = []                    # (w_h, w_c | None, b), unpadded f32
        self.ref_bn = []
        self.w_h_pad = []                       # layer-0 weight has ctx rows stacked
        self.w_ctx_pad = [None] * self.n_layers
        wc_blocks = []
        self.ctx_slices = [None] * self.n_layers
        off = 0
        for i in range(self.n_layers):
            d_in, d_out = in_dims[i], out_dims[i]
            inject = self.inject_ctx[i]
            fan_in = d_in + (self.context_dim if inject else 0)
            s = 1.0 / math.sqrt(float(fan_in))
            w_h = s * jax.random.normal(keys[2 * i], (d_in, d_out), jnp.float32)
            b = 0.01 * jnp.ones((d_out,), jnp.float32)
            w_c = (s * jax.random.normal(keys[2 * i + 1],
                                         (self.context_dim, d_out), jnp.float32)
                   if inject else None)
            self.ref_layers.append((w_h, w_c, b))

            n_pad = self.out_pads[i]
            if i == 0 and inject:
                wp = jnp.zeros((self.layer0_k, n_pad), jnp.float32)
                wp = wp.at[:d_in, :d_out].set(w_h)
                wp = wp.at[d_in:, :d_out].set(w_c)        # x first, then ctx
            else:
                k_rows = self.in_pads[i] if i > 0 else self.input_dim
                wp = jnp.zeros((k_rows, n_pad), jnp.float32)
                wp = wp.at[:d_in, :d_out].set(w_h)
            self.w_h_pad.append(wp.astype(cd))

            if inject and i >= 1:
                wcp = jnp.zeros((self.context_dim, n_pad), jnp.float32)
                wcp = wcp.at[:, :d_out].set(w_c)
                self.w_ctx_pad[i] = wcp.astype(cd)
                wc_blocks.append(wcp)
                self.ctx_slices[i] = slice(off, off + n_pad)
                off += n_pad
        self.w_ctx_all = (jnp.concatenate(wc_blocks, axis=1).astype(cd)
                          if wc_blocks else None)
        self.wc_total = off

        b_out = jnp.zeros((1, self.out_pads[-1]), jnp.float32)
        self.b_out_pad = b_out.at[0, :self.output_total_dim].set(self.ref_layers[-1][2])

        # BatchNorm affine (PyTorch init weight=1, bias=0).  gamma is ZERO on lane
        # padding columns so padded lanes stay exactly 0 even if padded weight /
        # variance columns are ever perturbed (e.g. loaded checkpoints).
        self.bn_pad = []
        for i, d in enumerate(self.hidden_dims):
            self.ref_bn.append((jnp.ones((d,), jnp.float32),
                                jnp.zeros((d,), jnp.float32)))
            g = jnp.zeros((1, self.out_pads[i]), jnp.float32).at[0, :d].set(1.0)
            self.bn_pad.append((g, jnp.zeros((1, self.out_pads[i]), jnp.float32)))

        self._kernel_fused = _make_fused_kernel(self.n_layers, self.has_deep_ctx,
                                                self.ctx_slices, cd)
        self._kernels_tiled = [
            _make_tiled_kernel(bn_input=(i > 0),
                               add_ctx=(self.has_deep_ctx and i >= 1),
                               emit_stats=(i < self.n_layers - 1),
                               compute_dtype=cd)
            for i in range(self.n_layers)
        ]

        self._vmem_budget = _vmem_budget_bytes()
        # default batch tile for the tiled path (smaller budget on v7x -> smaller tile)
        self._default_tile = 256 if self._vmem_budget > (80 << 20) else 128
        self._tile_step = 16 if jnp.dtype(cd).itemsize < 4 else 8

    # ------------------------------------------------------------------ helpers
    def _fused_vmem_estimate(self, batch):
        itemsize = jnp.dtype(self.compute_dtype).itemsize
        w_bytes = sum(int(w.size) * itemsize for w in self.w_h_pad)
        if self.w_ctx_all is not None:
            w_bytes += int(self.w_ctx_all.size) * itemsize
        small = int(self.b_out_pad.size) * 4 + sum(
            int(g.size + b.size) * 4 for g, b in self.bn_pad)
        x_bytes = batch * self.layer0_k * itemsize
        act_bytes = batch * (sum(self.out_pads) * (4 + itemsize)
                             + self.out_pads[-1] * 4)
        return w_bytes + small + x_bytes + act_bytes

    def _split_outputs(self, out_padded):
        out = out_padded[..., :self.output_total_dim]     # drop lane padding
        if self.n_output_layers == 1:
            return out
        return tuple(out[..., s] for s in self.output_slices)

    # ------------------------------------------------------------------ forward
    def __call__(self, x, context=None, batch_tile=None):
        x = jnp.asarray(x, jnp.float32)
        batch = x.shape[0]
        ctx = None
        if self.has_ctx:
            ctx = jnp.asarray(context, jnp.float32)
            if ctx.ndim == 1:
                ctx = ctx[None, :]
        # Fold context into the first matmul ([x | ctx] vs stacked [W_h0; W_c0]).
        if self.inject_ctx[0]:
            ctx_b = jnp.broadcast_to(ctx, (batch, self.context_dim))
            x_in = jnp.concatenate([x, ctx_b], axis=-1)
        else:
            x_in = x
        x_in = x_in.astype(self.compute_dtype)

        tb = None
        if batch_tile is not None:
            tb = _pick_tile(batch, batch_tile, self._tile_step)
        elif self._fused_vmem_estimate(batch) > 0.45 * self._vmem_budget:
            tb = _pick_tile(batch, self._default_tile, self._tile_step)
        if tb is not None:
            out = self._forward_tiled(x_in, ctx, batch, tb)
        else:
            # TODO(synk): batches not tileable into multiples of 8/16 always take
            # the fused path; a masked ragged-tile variant (BN stats ignoring pad
            # rows) would be needed to batch-tile them safely.
            out = self._forward_fused(x_in, ctx, batch)
        return self._split_outputs(out)

    def _forward_fused(self, x_in, ctx, batch):
        args = [x_in]
        ctx_rows = 0
        if self.has_deep_ctx:
            ctx_rows = ctx.shape[0]
            args.append(ctx)                 # (1,C) stays (1,C): broadcast in-kernel
            args.append(self.w_ctx_all)
        args.extend(self.w_h_pad)
        args.append(self.b_out_pad)
        for g, b in self.bn_pad:
            args.append(g)
            args.append(b)

        out_pad = self.out_pads[-1]
        need = self._fused_vmem_estimate(batch)
        vmem_limit = int(min(max(2 * need, 16 << 20), self._vmem_budget))

        flops = 2 * batch * self.layer0_k * self.out_pads[0]
        for i in range(1, self.n_layers):
            flops += 2 * batch * self.in_pads[i] * self.out_pads[i]
        if self.w_ctx_all is not None:
            flops += 2 * ctx_rows * self.context_dim * self.wc_total
        transcendentals = sum(self.out_pads[:-1])          # one rsqrt per hidden feat
        arg_bytes = int(sum(int(a.size) * a.dtype.itemsize for a in args))
        out_bytes = batch * out_pad * 4

        return pl.pallas_call(
            self._kernel_fused,
            out_shape=jax.ShapeDtypeStruct((batch, out_pad), jnp.float32),
            in_specs=[pl.BlockSpec(memory_space=pltpu.MemorySpace.VMEM)] * len(args),
            out_specs=pl.BlockSpec(memory_space=pltpu.MemorySpace.VMEM),
            compiler_params=pltpu.CompilerParams(vmem_limit_bytes=vmem_limit),
            cost_estimate=pl.CostEstimate(flops=int(flops),
                                          transcendentals=int(transcendentals),
                                          bytes_accessed=int(arg_bytes + out_bytes)),
        )(*args)

    def _forward_tiled(self, x_in, ctx, batch, tb):
        """Batch-tiled path: one pallas_call per layer, 'parallel' batch axis,
        per-tile sum/sum-sq partials reduced in JAX (two-pass BN across tiles)."""
        n_tiles = batch // tb
        ctx_cd = ctx.astype(self.compute_dtype) if self.has_deep_ctx else None
        h = x_in
        scale = shift = None
        out = None
        for i in range(self.n_layers):
            is_last = i == self.n_layers - 1
            bn_input = i > 0
            add_ctx = self.has_deep_ctx and i >= 1
            n_pad = self.out_pads[i]
            k_dim = h.shape[1]

            args = [h]
            in_specs = [pl.BlockSpec((tb, k_dim), lambda t: (t, 0))]
            if bn_input:
                args += [scale, shift]
                in_specs += [pl.BlockSpec((1, k_dim), lambda t: (0, 0))] * 2
            if add_ctx:
                rows = ctx_cd.shape[0]
                args.append(ctx_cd)
                if rows == 1:
                    in_specs.append(pl.BlockSpec((1, self.context_dim),
                                                 lambda t: (0, 0)))
                else:
                    in_specs.append(pl.BlockSpec((tb, self.context_dim),
                                                 lambda t: (t, 0)))
                args.append(self.w_ctx_pad[i])
                in_specs.append(pl.BlockSpec(self.w_ctx_pad[i].shape,
                                             lambda t: (0, 0)))
            args.append(self.w_h_pad[i])
            in_specs.append(pl.BlockSpec(self.w_h_pad[i].shape, lambda t: (0, 0)))
            if is_last:
                args.append(self.b_out_pad)
                in_specs.append(pl.BlockSpec((1, n_pad), lambda t: (0, 0)))

            if is_last:
                out_shape = jax.ShapeDtypeStruct((batch, n_pad), jnp.float32)
                out_specs = pl.BlockSpec((tb, n_pad), lambda t: (t, 0))
            else:
                out_shape = (jax.ShapeDtypeStruct((batch, n_pad), jnp.float32),
                             jax.ShapeDtypeStruct((8 * n_tiles, n_pad), jnp.float32))
                out_specs = (pl.BlockSpec((tb, n_pad), lambda t: (t, 0)),
                             pl.BlockSpec((8, n_pad), lambda t: (t, 0)))

            res = pl.pallas_call(
                self._kernels_tiled[i],
                out_shape=out_shape,
                grid=(n_tiles,),
                in_specs=in_specs,
                out_specs=out_specs,
                compiler_params=pltpu.CompilerParams(
                    dimension_semantics=("parallel",),
                    vmem_limit_bytes=int(self._vmem_budget)),
            )(*args)

            if is_last:
                out = res
            else:
                pre, stats = res
                st = stats.reshape(n_tiles, 8, n_pad)
                mean = jnp.sum(st[:, 0, :], axis=0, keepdims=True) / batch
                ex2 = jnp.sum(st[:, 1, :], axis=0, keepdims=True) / batch
                var = jnp.maximum(ex2 - mean * mean, 0.0)
                gamma, beta = self.bn_pad[i]                 # gamma=0 on padding cols
                scale = gamma * lax.rsqrt(var + _BN_EPS)
                shift = beta - mean * scale
                h = pre
        return out

    def forward_stacked(self, xs, contexts=None):
        """Fuse several independent forward calls into one pallas_call.

        xs: (n_calls, batch, input_dim); contexts: (n_calls, batch | 1, context_dim).
        The call axis is a 'parallel' grid axis (v7x dual-TC, DMA/compute overlap);
        weights use constant index_maps so they are DMA'd to VMEM once.  BN stats
        remain per-call (full per-call batch), preserving module semantics.
        """
        xs = jnp.asarray(xs, jnp.float32)
        n_calls, batch, _ = xs.shape
        ctxs = jnp.asarray(contexts, jnp.float32) if self.has_ctx else None
        if self.inject_ctx[0]:
            ctx_b = jnp.broadcast_to(ctxs, (n_calls, batch, self.context_dim))
            xs_in = jnp.concatenate([xs, ctx_b], axis=-1)
        else:
            xs_in = xs
        xs_in = xs_in.astype(self.compute_dtype)

        args = [xs_in]
        in_specs = [pl.BlockSpec((pl.Squeezed(), batch, xs_in.shape[-1]),
                                 lambda c: (c, 0, 0))]
        if self.has_deep_ctx:
            rows = ctxs.shape[1]
            args.append(ctxs)
            in_specs.append(pl.BlockSpec((pl.Squeezed(), rows, self.context_dim),
                                         lambda c: (c, 0, 0)))
            args.append(self.w_ctx_all)
            in_specs.append(pl.BlockSpec(self.w_ctx_all.shape, lambda c: (0, 0)))
        for w in self.w_h_pad:
            args.append(w)
            in_specs.append(pl.BlockSpec(w.shape, lambda c: (0, 0)))
        args.append(self.b_out_pad)
        in_specs.append(pl.BlockSpec(self.b_out_pad.shape, lambda c: (0, 0)))
        for g, b in self.bn_pad:
            args.append(g)
            in_specs.append(pl.BlockSpec(g.shape, lambda c: (0, 0)))
            args.append(b)
            in_specs.append(pl.BlockSpec(b.shape, lambda c: (0, 0)))

        out_pad = self.out_pads[-1]
        need = self._fused_vmem_estimate(batch)
        vmem_limit = int(min(max(2 * need, 16 << 20), self._vmem_budget))

        out = pl.pallas_call(
            self._kernel_fused,
            out_shape=jax.ShapeDtypeStruct((n_calls, batch, out_pad), jnp.float32),
            grid=(n_calls,),
            in_specs=in_specs,
            out_specs=pl.BlockSpec((pl.Squeezed(), batch, out_pad),
                                   lambda c: (c, 0, 0)),
            compiler_params=pltpu.CompilerParams(
                dimension_semantics=("parallel",),
                vmem_limit_bytes=vmem_limit),
        )(*args)
        return self._split_outputs(out)

    # ---------------------------------------------------------------- reference
    def reference(self, x, context=None):
        """Pure-JAX mirror of the PyTorch forward (hidden biases + two-pass BN)."""
        h = jnp.asarray(x, jnp.float32)
        ctx = None
        if self.has_ctx:
            ctx = jnp.asarray(context, jnp.float32)
            ctx = jnp.broadcast_to(ctx, h.shape[:-1] + (self.context_dim,))
        for i, (w_h, w_c, b) in enumerate(self.ref_layers):
            pre = h @ w_h + b
            if w_c is not None:
                pre = pre + ctx @ w_c
            if i < self.n_layers - 1:
                gamma, beta = self.ref_bn[i]
                mean = jnp.mean(pre, axis=0, keepdims=True)
                var = jnp.mean((pre - mean) ** 2, axis=0, keepdims=True)
                pre = (pre - mean) / jnp.sqrt(var + _BN_EPS) * gamma + beta
                pre = jnp.maximum(pre, 0.0)
            h = pre
        if self.n_output_layers == 1:
            return h
        return tuple(h[..., s] for s in self.output_slices)


def _check(name, got, want, atol=1e-3, rtol=1e-3):
    if isinstance(got, tuple):
        assert isinstance(want, tuple) and len(got) == len(want), name
        for g, w in zip(got, want):
            assert g.shape == w.shape, (name, g.shape, w.shape)
            assert bool(jnp.all(jnp.isfinite(g))), f"{name}: non-finite"
            assert jnp.allclose(g, w, atol=atol, rtol=rtol), f"{name}: mismatch"
    else:
        assert got.shape == want.shape, (name, got.shape, want.shape)
        assert bool(jnp.all(jnp.isfinite(got))), f"{name}: non-finite"
        assert jnp.allclose(got, want, atol=atol, rtol=rtol), f"{name}: mismatch"


if __name__ == "__main__":
    key = jax.random.PRNGKey(0)
    kx, kc, kp1, kp2, kp3, kp4, kxl, kcl = jax.random.split(key, 8)

    batch, input_dim, context_dim = 8, 16, 8
    x = jax.random.normal(kx, (batch, input_dim), jnp.float32)
    context = jax.random.normal(kc, (batch, context_dim), jnp.float32)

    # 1) fused path, deep context injection, multiple output heads (f32 numerics)
    m1 = ConditionalDenseNNPallas(input_dim, (32, 32), output_dims=(8, 4),
                                  context_dim=context_dim,
                                  deep_context_injection=True,
                                  compute_dtype=jnp.float32, key=kp1)
    out1 = jax.block_until_ready(m1(x, context))
    _check("deep_ctx_multi_out", out1, m1.reference(x, context), 2e-3, 2e-3)

    # 2) fused path, context only at the first layer, single output head
    m2 = ConditionalDenseNNPallas(input_dim, (32,), output_dims=(4,),
                                  context_dim=context_dim,
                                  deep_context_injection=False,
                                  compute_dtype=jnp.float32, key=kp2)
    out2 = jax.block_until_ready(m2(x, context))
    _check("first_layer_ctx", out2, m2.reference(x, context), 2e-3, 2e-3)

    # 3) no hidden layers, no context (plain Linear)
    m3 = ConditionalDenseNNPallas(input_dim, (), output_dims=(6,), context_dim=0,
                                  compute_dtype=jnp.float32, key=kp3)
    out3 = jax.block_until_ready(m3(x))
    _check("linear_only", out3, m3.reference(x), 2e-3, 2e-3)

    # 4) batch-tiled two-pass-BN grid path (forced with batch_tile)
    batch_l = 256
    xl = jax.random.normal(kxl, (batch_l, input_dim), jnp.float32)
    cl = jax.random.normal(kcl, (batch_l, context_dim), jnp.float32)
    m4 = ConditionalDenseNNPallas(input_dim, (32, 32), output_dims=(8, 4),
                                  context_dim=context_dim,
                                  deep_context_injection=True,
                                  compute_dtype=jnp.float32, key=kp4)
    out4 = jax.block_until_ready(m4(xl, cl, batch_tile=64))
    _check("tiled_batch_bn", out4, m4.reference(xl, cl), 5e-3, 5e-3)

    # 5) stacked-calls path: several independent forwards in one pallas_call
    xs = jnp.stack([x, x + 0.5, x * 0.3])
    cs = jnp.stack([context, context * 0.7, context + 0.2])
    out5 = jax.block_until_ready(m1.forward_stacked(xs, cs))
    for c in range(3):
        got_c = tuple(o[c] for o in out5)
        _check(f"stacked_call_{c}", got_c, m1.reference(xs[c], cs[c]), 2e-3, 2e-3)

    # 6) auto compute dtype (bf16 MXU operands on v6e/v7x, f32 elsewhere)
    m6 = ConditionalDenseNNPallas(input_dim, (32, 32), output_dims=(8, 4),
                                  context_dim=context_dim,
                                  deep_context_injection=True, key=kp1)
    out6 = jax.block_until_ready(m6(x, context))
    ref6 = m6.reference(x, context)
    if jnp.dtype(m6.compute_dtype) == jnp.dtype(jnp.bfloat16):
        _check("auto_dtype_bf16", out6, ref6, 2e-1, 2e-1)
    else:
        _check("auto_dtype_f32", out6, ref6, 2e-3, 2e-3)

    print("KERNEL_OK")
</pallas_src>

<mosaic_0001>
module attributes {stable_mosaic.version = 11 : i64} {
  func.func @kernel(%arg0: memref<8x24xf32, #tpu.memory_space<vmem>>, %arg1: memref<8x8xf32, #tpu.memory_space<vmem>>, %arg2: memref<8x256xf32, #tpu.memory_space<vmem>>, %arg3: memref<24x128xf32, #tpu.memory_space<vmem>>, %arg4: memref<128x128xf32, #tpu.memory_space<vmem>>, %arg5: memref<128x128xf32, #tpu.memory_space<vmem>>, %arg6: memref<1x128xf32, #tpu.memory_space<vmem>>, %arg7: memref<1x128xf32, #tpu.memory_space<vmem>>, %arg8: memref<1x128xf32, #tpu.memory_space<vmem>>, %arg9: memref<1x128xf32, #tpu.memory_space<vmem>>, %arg10: memref<1x128xf32, #tpu.memory_space<vmem>>, %arg11: memref<8x128xf32, #tpu.memory_space<vmem>>) attributes {dimension_semantics = [], scalar_prefetch = 0 : i64, scratch_operands = 0 : i64, tpu.core_type = #tpu.core_type<tc>} {
    %c0 = arith.constant 0 : index
    %c0_0 = arith.constant 0 : index
    %0 = vector.load %arg1[%c0, %c0_0] : memref<8x8xf32, #tpu.memory_space<vmem>>, vector<8x8xf32>
    %c0_1 = arith.constant 0 : index
    %c0_2 = arith.constant 0 : index
    %1 = vector.load %arg2[%c0_1, %c0_2] : memref<8x256xf32, #tpu.memory_space<vmem>>, vector<8x256xf32>
    %cst = arith.constant dense<0.000000e+00> : vector<8x256xf32>
    %2 = tpu.matmul %0, %1, %cst {dimension_numbers = #tpu.dot_dimension_numbers<[1], [0], [0], [1], [0, 0, 1, 1], [], []>} : vector<8x8xf32>, vector<8x256xf32>, vector<8x256xf32> -> vector<8x256xf32>
    %c0_3 = arith.constant 0 : index
    %c0_4 = arith.constant 0 : index
    %3 = vector.load %arg0[%c0_3, %c0_4] : memref<8x24xf32, #tpu.memory_space<vmem>>, vector<8x24xf32>
    %c0_5 = arith.constant 0 : index
    %c0_6 = arith.constant 0 : index
    %4 = vector.load %arg3[%c0_5, %c0_6] : memref<24x128xf32, #tpu.memory_space<vmem>>, vector<24x128xf32>
    %cst_7 = arith.constant dense<0.000000e+00> : vector<8x128xf32>
    %5 = tpu.matmul %3, %4, %cst_7 {dimension_numbers = #tpu.dot_dimension_numbers<[1], [0], [0], [1], [0, 0, 1, 1], [], []>} : vector<8x24xf32>, vector<24x128xf32>, vector<8x128xf32> -> vector<8x128xf32>
    %cst_8 = arith.constant dense<0.000000e+00> : vector<128xf32>
    %6 = vector.multi_reduction <add>, %5, %cst_8 [0] : vector<8x128xf32> to vector<128xf32>
    %7 = vector.shape_cast %6 : vector<128xf32> to vector<1x128xf32>
    %cst_9 = arith.constant 1.250000e-01 : f32
    %8 = vector.broadcast %cst_9 : f32 to vector<1x128xf32>
    %9 = arith.mulf %7, %8 : vector<1x128xf32>
    %10 = vector.broadcast %9 : vector<1x128xf32> to vector<8x128xf32>
    %11 = arith.subf %5, %10 : vector<8x128xf32>
    %12 = arith.mulf %11, %11 : vector<8x128xf32>
    %cst_10 = arith.constant dense<0.000000e+00> : vector<128xf32>
    %13 = vector.multi_reduction <add>, %12, %cst_10 [0] : vector<8x128xf32> to vector<128xf32>
    %14 = vector.shape_cast %13 : vector<128xf32> to vector<1x128xf32>
    %cst_11 = arith.constant 1.250000e-01 : f32
    %15 = vector.broadcast %cst_11 : f32 to vector<1x128xf32>
    %16 = arith.mulf %14, %15 : vector<1x128xf32>
    %c0_12 = arith.constant 0 : index
    %c0_13 = arith.constant 0 : index
    %17 = vector.load %arg7[%c0_12, %c0_13] : memref<1x128xf32, #tpu.memory_space<vmem>>, vector<1x128xf32>
    %cst_14 = arith.constant 9.99999974E-6 : f32
    %18 = vector.broadcast %cst_14 : f32 to vector<1x128xf32>
    %19 = arith.addf %16, %18 : vector<1x128xf32>
    %20 = math.rsqrt %19 : vector<1x128xf32>
    %21 = arith.mulf %17, %20 : vector<1x128xf32>
    %22 = vector.broadcast %21 : vector<1x128xf32> to vector<8x128xf32>
    %23 = arith.mulf %11, %22 : vector<8x128xf32>
    %c0_15 = arith.constant 0 : index
    %c0_16 = arith.constant 0 : index
    %24 = vector.load %arg8[%c0_15, %c0_16] : memref<1x128xf32, #tpu.memory_space<vmem>>, vector<1x128xf32>
    %25 = vector.broadcast %24 : vector<1x128xf32> to vector<8x128xf32>
    %26 = arith.addf %23, %25 : vector<8x128xf32>
    %cst_17 = arith.constant 0.000000e+00 : f32
    %27 = vector.broadcast %cst_17 : f32 to vector<8x128xf32>
    %28 = arith.maximumf %26, %27 : vector<8x128xf32>
    %c0_18 = arith.constant 0 : index
    %c0_19 = arith.constant 0 : index
    %29 = vector.load %arg4[%c0_18, %c0_19] : memref<128x128xf32, #tpu.memory_space<vmem>>, vector<128x128xf32>
    %cst_20 = arith.constant dense<0.000000e+00> : vector<8x128xf32>
    %30 = tpu.matmul %28, %29, %cst_20 {dimension_numbers = #tpu.dot_dimension_numbers<[1], [0], [0], [1], [0, 0, 1, 1], [], []>} : vector<8x128xf32>, vector<128x128xf32>, vector<8x128xf32> -> vector<8x128xf32>
    %31 = vector.extract_strided_slice %2 {offsets = [0, 0], sizes = [8, 128], strides = [1, 1]} : vector<8x256xf32> to vector<8x128xf32>
    %32 = arith.addf %30, %31 : vector<8x128xf32>
    %cst_21 = arith.constant dense<0.000000e+00> : vector<128xf32>
    %33 = vector.multi_reduction <add>, %32, %cst_21 [0] : vector<8x128xf32> to vector<128xf32>
    %34 = vector.shape_cast %33 : vector<128xf32> to vector<1x128xf32>
    %cst_22 = arith.constant 1.250000e-01 : f32
    %35 = vector.broadcast %cst_22 : f32 to vector<1x128xf32>
    %36 = arith.mulf %34, %35 : vector<1x128xf32>
    %37 = vector.broadcast %36 : vector<1x128xf32> to vector<8x128xf32>
    %38 = arith.subf %32, %37 : vector<8x128xf32>
    %39 = arith.mulf %38, %38 : vector<8x128xf32>
    %cst_23 = arith.constant dense<0.000000e+00> : vector<128xf32>
    %40 = vector.multi_reduction <add>, %39, %cst_23 [0] : vector<8x128xf32> to vector<128xf32>
    %41 = vector.shape_cast %40 : vector<128xf32> to vector<1x128xf32>
    %cst_24 = arith.constant 1.250000e-01 : f32
    %42 = vector.broadcast %cst_24 : f32 to vector<1x128xf32>
    %43 = arith.mulf %41, %42 : vector<1x128xf32>
    %c0_25 = arith.constant 0 : index
    %c0_26 = arith.constant 0 : index
    %44 = vector.load %arg9[%c0_25, %c0_26] : memref<1x128xf32, #tpu.memory_space<vmem>>, vector<1x128xf32>
    %cst_27 = arith.constant 9.99999974E-6 : f32
    %45 = vector.broadcast %cst_27 : f32 to vector<1x128xf32>
    %46 = arith.addf %43, %45 : vector<1x128xf32>
    %47 = math.rsqrt %46 : vector<1x128xf32>
    %48 = arith.mulf %44, %47 : vector<1x128xf32>
    %49 = vector.broadcast %48 : vector<1x128xf32> to vector<8x128xf32>
    %50 = arith.mulf %38, %49 : vector<8x128xf32>
    %c0_28 = arith.constant 0 : index
    %c0_29 = arith.constant 0 : index
    %51 = vector.load %arg10[%c0_28, %c0_29] : memref<1x128xf32, #tpu.memory_space<vmem>>, vector<1x128xf32>
    %52 = vector.broadcast %51 : vector<1x128xf32> to vector<8x128xf32>
    %53 = arith.addf %50, %52 : vector<8x128xf32>
    %cst_30 = arith.constant 0.000000e+00 : f32
    %54 = vector.broadcast %cst_30 : f32 to vector<8x128xf32>
    %55 = arith.maximumf %53, %54 : vector<8x128xf32>
    %c0_31 = arith.constant 0 : index
    %c0_32 = arith.constant 0 : index
    %56 = vector.load %arg5[%c0_31, %c0_32] : memref<128x128xf32, #tpu.memory_space<vmem>>, vector<128x128xf32>
    %cst_33 = arith.constant dense<0.000000e+00> : vector<8x128xf32>
    %57 = tpu.matmul %55, %56, %cst_33 {dimension_numbers = #tpu.dot_dimension_numbers<[1], [0], [0], [1], [0, 0, 1, 1], [], []>} : vector<8x128xf32>, vector<128x128xf32>, vector<8x128xf32> -> vector<8x128xf32>
    %58 = vector.extract_strided_slice %2 {offsets = [0, 128], sizes = [8, 128], strides = [1, 1]} : vector<8x256xf32> to vector<8x128xf32>
    %59 = arith.addf %57, %58 : vector<8x128xf32>
    %c0_34 = arith.constant 0 : index
    %c0_35 = arith.constant 0 : index
    %60 = vector.load %arg6[%c0_34, %c0_35] : memref<1x128xf32, #tpu.memory_space<vmem>>, vector<1x128xf32>
    %61 = vector.broadcast %60 : vector<1x128xf32> to vector<8x128xf32>
    %62 = arith.addf %59, %61 : vector<8x128xf32>
    %c0_36 = arith.constant 0 : index
    %c0_37 = arith.constant 0 : index
    %63 = vector.load %arg11[%c0_36, %c0_37] : memref<8x128xf32, #tpu.memory_space<vmem>>, vector<8x128xf32>
    tpu.vector_store %arg11[%c0_36, %c0_37], %62 {strides = array<i32>} : memref<8x128xf32, #tpu.memory_space<vmem>>, vector<8x128xf32>,
    return
  }
}

</mosaic_0001>

<llo_original>
// kernel: tpu_custom_call.1
$region0: #{tpu_custom_call.1}
  #allocation0 [shape = 'u32[]', space=smem, size = 0x4, offset = 0x4, fixed_abs, tag = 'smem constant byte address 0x4 - core index']
  #allocation1 [shape = 'u32[144,128]{1,0:T(1,128)}', space=vmem, size = 0x12000, scoped, tag = 'internal scratch']
  %s0 = inlined_call_operand.hbm [shape: f32[8,24], index: 0, kind: input, shape index: {}]
  %s1 = inlined_call_operand.hbm [shape: f32[8,8], index: 1, kind: input, shape index: {}]
  %s2 = inlined_call_operand.hbm [shape: f32[8,256], index: 2, kind: input, shape index: {}]
  %s3 = inlined_call_operand.hbm [shape: f32[24,128], index: 3, kind: input, shape index: {}]
  %s4 = inlined_call_operand.hbm [shape: f32[128,128], index: 4, kind: input, shape index: {}]
  %s5 = inlined_call_operand.hbm [shape: f32[128,128], index: 5, kind: input, shape index: {}]
  %s6 = inlined_call_operand.vmem [shape: f32[1,128], index: 6, kind: input, shape index: {}]
  %s7 = inlined_call_operand.vmem [shape: f32[1,128], index: 7, kind: input, shape index: {}]
  %s8 = inlined_call_operand.vmem [shape: f32[1,128], index: 8, kind: input, shape index: {}]
  %s9 = inlined_call_operand.vmem [shape: f32[1,128], index: 9, kind: input, shape index: {}]
  %s10 = inlined_call_operand.vmem [shape: f32[1,128], index: 10, kind: input, shape index: {}]
  %s11 = inlined_call_operand.hbm [shape: f32[8,128], index: 11, kind: output, shape index: {}]
  %s12 = sld [smem:[#allocation0]]
  $region78: #{tpu_custom_call.1} parent=0
    _
  %s14 = ssub.s32 1, %s12
  %s15 = scalar_select 0, %s14, %s12
  $region1: #{tpu_custom_call.1} parent=0
    #allocation2 [shape = 'u8[4096]{0}', space=vmem, size = 0x1000, scoped, tag = 'input window, operand 0, single buffered']
    #allocation3 [shape = 's32[1]{0}', space=sflag, size = 0x4, scoped, tag = 'scoped memory for tpu_custom_call.1']
    #allocation4 [shape = 's32[1]{0}', space=sflag, size = 0x4, scoped, tag = 'scoped memory for tpu_custom_call.1']
    #allocation5 [shape = 'u8[4096]{0}', space=vmem, size = 0x1000, scoped, tag = 'input window, operand 1, single buffered']
    #allocation6 [shape = 's32[1]{0}', space=sflag, size = 0x4, scoped, tag = 'scoped memory for tpu_custom_call.1']
    #allocation7 [shape = 'u8[8192]{0}', space=vmem, size = 0x2000, scoped, tag = 'input window, operand 2, single buffered']
    #allocation8 [shape = 'u8[12288]{0}', space=vmem, size = 0x3000, scoped, tag = 'input window, operand 3, single buffered']
    #allocation9 [shape = 's32[1]{0}', space=sflag, size = 0x4, scoped, tag = 'scoped memory for tpu_custom_call.1']
    #allocation10 [shape = 'u8[65536]{0}', space=vmem, size = 0x10000, scoped, tag = 'input window, operand 4, single buffered']
    #allocation11 [shape = 'u8[65536]{0}', space=vmem, size = 0x10000, scoped, tag = 'input window, operand 5, single buffered']
    #allocation12 [shape = 's32[1]{0}', space=sflag, size = 0x4, scoped, tag = 'scoped memory for tpu_custom_call.1']
    #allocation13 [shape = 'u8[4096]{0}', space=vmem, size = 0x1000, scoped, tag = 'output window, operand 0, single buffered']
    %16 = vsyncpa [#allocation3], 0
    %17 = vsyncpa [#allocation6], 0
    %18 = vsyncpa [#allocation9], 0
    %19 = vsyncpa [#allocation12], 0
    %20 = vsyncpa [#allocation4], 0
    // Predicated region
    $region2: #{tpu_custom_call.1} parent=1 // pred_check
      _
    $region3: #{tpu_custom_call.1} parent=1 // pred_check_branch
      %22 = sbr.rel (0) target = $region5
    $region4: #{tpu_custom_call.1} parent=1 // pred_region
      %s24 = ssub.s32 128, 128
      %25 = vsyncadd [#allocation3], %s24
      %s27 = sshll.u32 [#allocation2], 4
      %s28 = int_to_ptr.vmem [resolvable:$true] %s27
      %30 = dma.hbm_to_vmem [thread:$0]  %s0, 128, %s28, [#allocation3]
    $region5: #{tpu_custom_call.1} parent=1 // pred_fallthru
      _
    // Predicated region
    $region6: #{tpu_custom_call.1} parent=1 // pred_check
      _
    $region7: #{tpu_custom_call.1} parent=1 // pred_check_branch
      %32 = sbr.rel (0) target = $region9
    $region8: #{tpu_custom_call.1} parent=1 // pred_region
      %s34 = ssub.s32 128, 128
      %35 = vsyncadd [#allocation6], %s34
      %s37 = sshll.u32 [#allocation5], 4
      %s38 = int_to_ptr.vmem [resolvable:$true] %s37
      %40 = dma.hbm_to_vmem [thread:$0]  %s1, 128, %s38, [#allocation6]
    $region9: #{tpu_custom_call.1} parent=1 // pred_fallthru
      _
    // Predicated region
    $region10: #{tpu_custom_call.1} parent=1 // pred_check
      _
    $region11: #{tpu_custom_call.1} parent=1 // pred_check_branch
      %42 = sbr.rel (0) target = $region13
    $region12: #{tpu_custom_call.1} parent=1 // pred_region
      %s44 = ssub.s32 256, 256
      %45 = vsyncadd [#allocation6], %s44
      %s47 = sshll.u32 [#allocation7], 4
      %s48 = int_to_ptr.vmem [resolvable:$true] %s47
      %50 = dma.hbm_to_vmem [thread:$0]  %s2, 256, %s48, [#allocation6]
    $region13: #{tpu_custom_call.1} parent=1 // pred_fallthru
      _
    // Predicated region
    $region14: #{tpu_custom_call.1} parent=1 // pred_check
      _
    $region15: #{tpu_custom_call.1} parent=1 // pred_check_branch
      %52 = sbr.rel (0) target = $region17
    $region16: #{tpu_custom_call.1} parent=1 // pred_region
      %s54 = ssub.s32 384, 384
      %55 = vsyncadd [#allocation9], %s54
      %s56 = sshll.u32 [#allocation8], 4
      %s57 = int_to_ptr.vmem [resolvable:$true] %s56
      %62 = dma.hbm_to_vmem [thread:$0]  %s3, 384, %s57, [#allocation9], 128, 128, 8
    $region17: #{tpu_custom_call.1} parent=1 // pred_fallthru
      _
    // Predicated region
    $region18: #{tpu_custom_call.1} parent=1 // pred_check
      _
    $region19: #{tpu_custom_call.1} parent=1 // pred_check_branch
      %64 = sbr.rel (0) target = $region21
    $region20: #{tpu_custom_call.1} parent=1 // pred_region
      %s66 = ssub.s32 2048, 2048
      %67 = vsyncadd [#allocation9], %s66
      %s68 = sshll.u32 [#allocation10], 4
      %s69 = int_to_ptr.vmem [resolvable:$true] %s68
      %74 = dma.hbm_to_vmem [thread:$0]  %s4, 2048, %s69, [#allocation9], 128, 128, 8
    $region21: #{tpu_custom_call.1} parent=1 // pred_fallthru
      _
    // Predicated region
    $region22: #{tpu_custom_call.1} parent=1 // pred_check
      _
    $region23: #{tpu_custom_call.1} parent=1 // pred_check_branch
      %76 = sbr.rel (0) target = $region25
    $region24: #{tpu_custom_call.1} parent=1 // pred_region
      %s78 = ssub.s32 2048, 2048
      %79 = vsyncadd [#allocation12], %s78
      %s80 = sshll.u32 [#allocation11], 4
      %s81 = int_to_ptr.vmem [resolvable:$true] %s80
      %86 = dma.hbm_to_vmem [thread:$0]  %s5, 2048, %s81, [#allocation12], 128, 128, 8
    $region25: #{tpu_custom_call.1} parent=1 // pred_fallthru
      _
    // Predicated region
    $region26: #{tpu_custom_call.1} parent=1 // pred_check
      _
    $region27: #{tpu_custom_call.1} parent=1 // pred_check_branch
      %88 = sbr.rel (0) target = $region29
    $region28: #{tpu_custom_call.1} parent=1 // pred_region
      _
    $region29: #{tpu_custom_call.1} parent=1 // pred_fallthru
      _
    // Predicated region
    $region30: #{tpu_custom_call.1} parent=1 // pred_check
      _
    $region31: #{tpu_custom_call.1} parent=1 // pred_check_branch
      %90 = sbr.rel (0) target = $region33
    $region32: #{tpu_custom_call.1} parent=1 // pred_region
      _
    $region33: #{tpu_custom_call.1} parent=1 // pred_fallthru
      _
    // Predicated region
    $region34: #{tpu_custom_call.1} parent=1 // pred_check
      _
    $region35: #{tpu_custom_call.1} parent=1 // pred_check_branch
      %92 = sbr.rel (0) target = $region37
    $region36: #{tpu_custom_call.1} parent=1 // pred_region
      _
    $region37: #{tpu_custom_call.1} parent=1 // pred_fallthru
      _
    // Predicated region
    $region38: #{tpu_custom_call.1} parent=1 // pred_check
      _
    $region39: #{tpu_custom_call.1} parent=1 // pred_check_branch
      %94 = sbr.rel (0) target = $region41
    $region40: #{tpu_custom_call.1} parent=1 // pred_region
      _
    $region41: #{tpu_custom_call.1} parent=1 // pred_fallthru
      _
    // Predicated region
    $region42: #{tpu_custom_call.1} parent=1 // pred_check
      _
    $region43: #{tpu_custom_call.1} parent=1 // pred_check_branch
      %96 = sbr.rel (0) target = $region45
    $region44: #{tpu_custom_call.1} parent=1 // pred_region
      _
    $region45: #{tpu_custom_call.1} parent=1 // pred_fallthru
      _
    // Predicated region
    $region46: #{tpu_custom_call.1} parent=1 // pred_check
      _
    $region47: #{tpu_custom_call.1} parent=1 // pred_check_branch
      %98 = sbr.rel (0) target = $region49
    $region48: #{tpu_custom_call.1} parent=1 // pred_region
      %99 = dma.done [#allocation3], 128
    $region49: #{tpu_custom_call.1} parent=1 // pred_fallthru
      _
    // Predicated region
    $region50: #{tpu_custom_call.1} parent=1 // pred_check
      _
    $region51: #{tpu_custom_call.1} parent=1 // pred_check_branch
      %101 = sbr.rel (0) target = $region53
    $region52: #{tpu_custom_call.1} parent=1 // pred_region
      %102 = dma.done [#allocation6], 128
    $region53: #{tpu_custom_call.1} parent=1 // pred_fallthru
      _
    // Predicated region
    $region54: #{tpu_custom_call.1} parent=1 // pred_check
      _
    $region55: #{tpu_custom_call.1} parent=1 // pred_check_branch
      %104 = sbr.rel (0) target = $region57
    $region56: #{tpu_custom_call.1} parent=1 // pred_region
      %105 = dma.done [#allocation6], 256
    $region57: #{tpu_custom_call.1} parent=1 // pred_fallthru
      _
    // Predicated region
    $region58: #{tpu_custom_call.1} parent=1 // pred_check
      _
    $region59: #{tpu_custom_call.1} parent=1 // pred_check_branch
      %107 = sbr.rel (0) target = $region61
    $region60: #{tpu_custom_call.1} parent=1 // pred_region
      %108 = dma.done [#allocation9], 384
    $region61: #{tpu_custom_call.1} parent=1 // pred_fallthru
      _
    // Predicated region
    $region62: #{tpu_custom_call.1} parent=1 // pred_check
      _
    $region63: #{tpu_custom_call.1} parent=1 // pred_check_branch
      %110 = sbr.rel (0) target = $region65
    $region64: #{tpu_custom_call.1} parent=1 // pred_region
      %111 = dma.done [#allocation9], 2048
    $region65: #{tpu_custom_call.1} parent=1 // pred_fallthru
      _
    // Predicated region
    $region66: #{tpu_custom_call.1} parent=1 // pred_check
      _
    $region67: #{tpu_custom_call.1} parent=1 // pred_check_branch
      %113 = sbr.rel (0) target = $region69
    $region68: #{tpu_custom_call.1} parent=1 // pred_region
      %114 = dma.done [#allocation12], 2048
    $region69: #{tpu_custom_call.1} parent=1 // pred_fallthru
      _
    %v115 = vld [vmem:[#allocation5] sm:$0xff]
    %v116 = vld [vmem:[#allocation7] sm:$0xff]
    %v117 = vld [vmem:[#allocation7 + $0x8] sm:$0xff]
    %vm118 = vcmask 64512
    %v120 = vsel %vm118, %v115, 0
    %122 = vmatprep.subr.mxu0 %v117
    %123 = vmatpush1.msra.mxu0 %v116
    %124 = vmatprep.subr.mxu0 0.0
    %125 = vmatpush1.msra.mxu0 0.0
    %126 = vmatprep.subr.mxu0 0.0
    %127 = vmatpush1.msra.mxu0 0.0
    %128 = vmatprep.subr.mxu0 0.0
    %129 = vmatpush1.msra.mxu0 0.0
    %130 = vmatprep.subr.mxu0 0.0
    %131 = vmatpush1.msra.mxu0 0.0
    %132 = vmatprep.subr.mxu0 0.0
    %133 = vmatpush1.msra.mxu0 0.0
    %134 = vmatprep.subr.mxu0 0.0
    %135 = vmatpush1.msra.mxu0 0.0
    %136 = vmatprep.subr.mxu0 0.0
    %137 = vmatpush1.msra.mxu0 0.0
    %138 = vmatprep.subr.mxu0 0.0
    %139 = vmatpush1.msra.mxu0 0.0
    %140 = vmatprep.subr.mxu0 0.0
    %141 = vmatpush1.msra.mxu0 0.0
    %142 = vmatprep.subr.mxu0 0.0
    %143 = vmatpush1.msra.mxu0 0.0
    %144 = vmatprep.subr.mxu0 0.0
    %145 = vmatpush1.msra.mxu0 0.0
    %146 = vmatprep.subr.mxu0 0.0
    %147 = vmatpush1.msra.mxu0 0.0
    %148 = vmatprep.subr.mxu0 0.0
    %149 = vmatpush1.msra.mxu0 0.0
    %150 = vmatprep.subr.mxu0 0.0
    %151 = vmatpush1.msra.mxu0 0.0
    %152 = vmatprep.subr.mxu0 0.0
    %153 = vmatpush1.msra.mxu0 0.0
    %154 = vmatprep.subr.mxu0 0.0
    %155 = vmatpush1.msra.mxu0 0.0
    %156 = vmatprep.subr.mxu0 0.0
    %157 = vmatpush1.msra.mxu0 0.0
    %158 = vmatprep.subr.mxu0 0.0
    %159 = vmatpush1.msra.mxu0 0.0
    %160 = vmatprep.subr.mxu0 0.0
    %161 = vmatpush1.msra.mxu0 0.0
    %162 = vmatprep.subr.mxu0 0.0
    %163 = vmatpush1.msra.mxu0 0.0
    %164 = vmatprep.subr.mxu0 0.0
    %165 = vmatpush1.msra.mxu0 0.0
    %166 = vmatprep.subr.mxu0 0.0
    %167 = vmatpush1.msra.mxu0 0.0
    %168 = vmatprep.subr.mxu0 0.0
    %169 = vmatpush1.msra.mxu0 0.0
    %170 = vmatprep.subr.mxu0 0.0
    %171 = vmatpush1.msra.mxu0 0.0
    %172 = vmatprep.subr.mxu0 0.0
    %173 = vmatpush1.msra.mxu0 0.0
    %174 = vmatprep.subr.mxu0 0.0
    %175 = vmatpush1.msra.mxu0 0.0
    %176 = vmatprep.subr.mxu0 0.0
    %177 = vmatpush1.msra.mxu0 0.0
    %178 = vmatprep.subr.mxu0 0.0
    %179 = vmatpush1.msra.mxu0 0.0
    %180 = vmatprep.subr.mxu0 0.0
    %181 = vmatpush1.msra.mxu0 0.0
    %182 = vmatprep.subr.mxu0 0.0
    %183 = vmatpush1.msra.mxu0 0.0
    %184 = vmatprep.subr.mxu0 0.0
    %185 = vmatpush1.msra.mxu0 0.0
    %186 = vmatprep.mubr.f32.mxu0 0.0
    %187 = vmatmul.mubr.f32.gmra.mrb[0].mxu0 %v120
    %v188 = vpop.f32.mrb[0].mxu0
    %v189 = vadd.f32 0.0, %v188
    %v190 = vpop.f32.mrb[0].mxu0
    %v191 = vadd.f32 0.0, %v190
    %192 = vdwg.mxu0
    %v193 = vld [vmem:[#allocation2] sm:$0xff]
    %v194 = vld [vmem:[#allocation8] sm:$0xff]
    %v195 = vld [vmem:[#allocation8 + $0x8] sm:$0xff]
    %v196 = vld [vmem:[#allocation8 + $0x10] sm:$0xff]
    %vm197 = vcmask 195584
    %v199 = vsel %vm197, %v193, 0
    %201 = vmatprep.subr.mxu0 0.0
    %202 = vmatpush1.msra.mxu0 %v194
    %203 = vmatprep.subr.mxu0 0.0
    %204 = vmatpush1.msra.mxu0 %v195
    %205 = vmatprep.subr.mxu0 0.0
    %206 = vmatpush1.msra.mxu0 %v196
    %207 = vmatprep.subr.mxu0 0.0
    %208 = vmatpush1.msra.mxu0 0.0
    %209 = vmatprep.subr.mxu0 0.0
    %210 = vmatpush1.msra.mxu0 0.0
    %211 = vmatprep.subr.mxu0 0.0
    %212 = vmatpush1.msra.mxu0 0.0
    %213 = vmatprep.subr.mxu0 0.0
    %214 = vmatpush1.msra.mxu0 0.0
    %215 = vmatprep.subr.mxu0 0.0
    %216 = vmatpush1.msra.mxu0 0.0
    %217 = vmatprep.subr.mxu0 0.0
    %218 = vmatpush1.msra.mxu0 0.0
    %219 = vmatprep.subr.mxu0 0.0
    %220 = vmatpush1.msra.mxu0 0.0
    %221 = vmatprep.subr.mxu0 0.0
    %222 = vmatpush1.msra.mxu0 0.0
    %223 = vmatprep.subr.mxu0 0.0
    %224 = vmatpush1.msra.mxu0 0.0
    %225 = vmatprep.subr.mxu0 0.0
    %226 = vmatpush1.msra.mxu0 0.0
    %227 = vmatprep.subr.mxu0 0.0
    %228 = vmatpush1.msra.mxu0 0.0
    %229 = vmatprep.subr.mxu0 0.0
    %230 = vmatpush1.msra.mxu0 0.0
    %231 = vmatprep.subr.mxu0 0.0
    %232 = vmatpush1.msra.mxu0 0.0
    %233 = vmatprep.subr.mxu0 0.0
    %234 = vmatpush1.msra.mxu0 0.0
    %235 = vmatprep.subr.mxu0 0.0
    %236 = vmatpush1.msra.mxu0 0.0
    %237 = vmatprep.subr.mxu0 0.0
    %238 = vmatpush1.msra.mxu0 0.0
    %239 = vmatprep.subr.mxu0 0.0
    %240 = vmatpush1.msra.mxu0 0.0
    %241 = vmatprep.subr.mxu0 0.0
    %242 = vmatpush1.msra.mxu0 0.0
    %243 = vmatprep.subr.mxu0 0.0
    %244 = vmatpush1.msra.mxu0 0.0
    %245 = vmatprep.subr.mxu0 0.0
    %246 = vmatpush1.msra.mxu0 0.0
    %247 = vmatprep.subr.mxu0 0.0
    %248 = vmatpush1.msra.mxu0 0.0
    %249 = vmatprep.subr.mxu0 0.0
    %250 = vmatpush1.msra.mxu0 0.0
    %251 = vmatprep.subr.mxu0 0.0
    %252 = vmatpush1.msra.mxu0 0.0
    %253 = vmatprep.subr.mxu0 0.0
    %254 = vmatpush1.msra.mxu0 0.0
    %255 = vmatprep.subr.mxu0 0.0
    %256 = vmatpush1.msra.mxu0 0.0
    %257 = vmatprep.subr.mxu0 0.0
    %258 = vmatpush1.msra.mxu0 0.0
    %259 = vmatprep.subr.mxu0 0.0
    %260 = vmatpush1.msra.mxu0 0.0
    %261 = vmatprep.subr.mxu0 0.0
    %262 = vmatpush1.msra.mxu0 0.0
    %263 = vmatprep.subr.mxu0 0.0
    %264 = vmatpush1.msra.mxu0 0.0
    %265 = vmatprep.mubr.f32.mxu0 0.0
    %266 = vmatmul.mubr.f32.gmra.mrb[0].mxu0 %v199
    %v267 = vpop.f32.mrb[0].mxu0
    %v268 = vadd.f32 0.0, %v267
    %v269 = vpop.f32.mrb[0].mxu0
    %270 = vdwg.mxu0
    %v271 = vrot.slane %v268, 4
    %v272 = vadd.f32 %v268, %v271
    %v273 = vrot.slane %v272, 2
    %v274 = vadd.f32 %v272, %v273
    %v275 = vrot.slane %v274, 1
    %v276 = vadd.f32 %v274, %v275
    %v277 = vmul.f32 %v276, 0.125
    %v278 = vsub.f32 %v268, %v277
    %v279 = vmul.f32 %v278, %v278
    %v280 = vrot.slane %v279, 4
    %v281 = vadd.f32 %v279, %v280
    %v282 = vrot.slane %v281, 2
    %v283 = vadd.f32 %v281, %v282
    %v284 = vrot.slane %v283, 1
    %v285 = vadd.f32 %v283, %v284
    %v286 = vmul.f32 %v285, 0.125
    %v287 = vld [vmem:[%s7] sm:$0x1]
    %v288 = vadd.f32 %v286, 1e-05
    %v289 = vrsqrt.pop %v288
    %v290 = vmul.f32 %v287, %v289
    %v292 = vlaneseq
    %v293 = vshrl.u32 %v292, 7
    %v294 = vsub.s32 0, %v293
    %v295 = vrot.slane %v290, %v294
    %v297 = vmul.f32 %v278, %v295
    %v298 = vld [vmem:[%s8] sm:$0x1]
    %v300 = vlaneseq
    %v301 = vshrl.u32 %v300, 7
    %v302 = vsub.s32 0, %v301
    %v303 = vrot.slane %v298, %v302
    %v305 = vadd.f32 %v297, %v303
    %v306 = vmax.f32 %v305, 0.0
    %v307 = vld [vmem:[#allocation10] sm:$0xff]
    %v308 = vld [vmem:[#allocation10 + $0x8] sm:$0xff]
    %v309 = vld [vmem:[#allocation10 + $0x10] sm:$0xff]
    %v310 = vld [vmem:[#allocation10 + $0x18] sm:$0xff]
    %v311 = vld [vmem:[#allocation10 + $0x20] sm:$0xff]
    %v312 = vld [vmem:[#allocation10 + $0x28] sm:$0xff]
    %v313 = vld [vmem:[#allocation10 + $0x30] sm:$0xff]
    %v314 = vld [vmem:[#allocation10 + $0x38] sm:$0xff]
    %v315 = vld [vmem:[#allocation10 + $0x40] sm:$0xff]
    %v316 = vld [vmem:[#allocation10 + $0x48] sm:$0xff]
    %v317 = vld [vmem:[#allocation10 + $0x50] sm:$0xff]
    %v318 = vld [vmem:[#allocation10 + $0x58] sm:$0xff]
    %v319 = vld [vmem:[#allocation10 + $0x60] sm:$0xff]
    %v320 = vld [vmem:[#allocation10 + $0x68] sm:$0xff]
    %v321 = vld [vmem:[#allocation10 + $0x70] sm:$0xff]
    %v322 = vld [vmem:[#allocation10 + $0x78] sm:$0xff]
    %323 = vmatprep.subr.mxu0 0.0
    %324 = vmatpush1.msra.mxu0 %v307
    %325 = vmatprep.subr.mxu0 0.0
    %326 = vmatpush1.msra.mxu0 %v308
    %327 = vmatprep.subr.mxu0 0.0
    %328 = vmatpush1.msra.mxu0 %v309
    %329 = vmatprep.subr.mxu0 0.0
    %330 = vmatpush1.msra.mxu0 %v310
    %331 = vmatprep.subr.mxu0 0.0
    %332 = vmatpush1.msra.mxu0 %v311
    %333 = vmatprep.subr.mxu0 0.0
    %334 = vmatpush1.msra.mxu0 %v312
    %335 = vmatprep.subr.mxu0 0.0
    %336 = vmatpush1.msra.mxu0 %v313
    %337 = vmatprep.subr.mxu0 0.0
    %338 = vmatpush1.msra.mxu0 %v314
    %339 = vmatprep.subr.mxu0 0.0
    %340 = vmatpush1.msra.mxu0 %v315
    %341 = vmatprep.subr.mxu0 0.0
    %342 = vmatpush1.msra.mxu0 %v316
    %343 = vmatprep.subr.mxu0 0.0
    %344 = vmatpush1.msra.mxu0 %v317
    %345 = vmatprep.subr.mxu0 0.0
    %346 = vmatpush1.msra.mxu0 %v318
    %347 = vmatprep.subr.mxu0 0.0
    %348 = vmatpush1.msra.mxu0 %v319
    %349 = vmatprep.subr.mxu0 0.0
    %350 = vmatpush1.msra.mxu0 %v320
    %351 = vmatprep.subr.mxu0 0.0
    %352 = vmatpush1.msra.mxu0 %v321
    %353 = vmatprep.subr.mxu0 0.0
    %354 = vmatpush1.msra.mxu0 %v322
    %355 = vmatprep.subr.mxu0 0.0
    %356 = vmatpush1.msra.mxu0 0.0
    %357 = vmatprep.subr.mxu0 0.0
    %358 = vmatpush1.msra.mxu0 0.0
    %359 = vmatprep.subr.mxu0 0.0
    %360 = vmatpush1.msra.mxu0 0.0
    %361 = vmatprep.subr.mxu0 0.0
    %362 = vmatpush1.msra.mxu0 0.0
    %363 = vmatprep.subr.mxu0 0.0
    %364 = vmatpush1.msra.mxu0 0.0
    %365 = vmatprep.subr.mxu0 0.0
    %366 = vmatpush1.msra.mxu0 0.0
    %367 = vmatprep.subr.mxu0 0.0
    %368 = vmatpush1.msra.mxu0 0.0
    %369 = vmatprep.subr.mxu0 0.0
    %370 = vmatpush1.msra.mxu0 0.0
    %371 = vmatprep.subr.mxu0 0.0
    %372 = vmatpush1.msra.mxu0 0.0
    %373 = vmatprep.subr.mxu0 0.0
    %374 = vmatpush1.msra.mxu0 0.0
    %375 = vmatprep.subr.mxu0 0.0
    %376 = vmatpush1.msra.mxu0 0.0
    %377 = vmatprep.subr.mxu0 0.0
    %378 = vmatpush1.msra.mxu0 0.0
    %379 = vmatprep.subr.mxu0 0.0
    %380 = vmatpush1.msra.mxu0 0.0
    %381 = vmatprep.subr.mxu0 0.0
    %382 = vmatpush1.msra.mxu0 0.0
    %383 = vmatprep.subr.mxu0 0.0
    %384 = vmatpush1.msra.mxu0 0.0
    %385 = vmatprep.subr.mxu0 0.0
    %386 = vmatpush1.msra.mxu0 0.0
    %387 = vmatprep.mubr.f32.mxu0 0.0
    %388 = vmatmul.mubr.f32.gmra.mrb[0].mxu0 %v306
    %v389 = vpop.f32.mrb[0].mxu0
    %v390 = vadd.f32 %v189, %v389
    %v391 = vpop.f32.mrb[0].mxu0
    %392 = vdwg.mxu0
    %v393 = vrot.slane %v390, 4
    %v394 = vadd.f32 %v390, %v393
    %v395 = vrot.slane %v394, 2
    %v396 = vadd.f32 %v394, %v395
    %v397 = vrot.slane %v396, 1
    %v398 = vadd.f32 %v396, %v397
    %v399 = vmul.f32 %v398, 0.125
    %v400 = vsub.f32 %v390, %v399
    %v401 = vmul.f32 %v400, %v400
    %v402 = vrot.slane %v401, 4
    %v403 = vadd.f32 %v401, %v402
    %v404 = vrot.slane %v403, 2
    %v405 = vadd.f32 %v403, %v404
    %v406 = vrot.slane %v405, 1
    %v407 = vadd.f32 %v405, %v406
    %v408 = vmul.f32 %v407, 0.125
    %v409 = vld [vmem:[%s9] sm:$0x1]
    %v410 = vadd.f32 %v408, 1e-05
    %v411 = vrsqrt.pop %v410
    %v412 = vmul.f32 %v409, %v411
    %v414 = vlaneseq
    %v415 = vshrl.u32 %v414, 7
    %v416 = vsub.s32 0, %v415
    %v417 = vrot.slane %v412, %v416
    %v419 = vmul.f32 %v400, %v417
    %v420 = vld [vmem:[%s10] sm:$0x1]
    %v422 = vlaneseq
    %v423 = vshrl.u32 %v422, 7
    %v424 = vsub.s32 0, %v423
    %v425 = vrot.slane %v420, %v424
    %v427 = vadd.f32 %v419, %v425
    %v428 = vmax.f32 %v427, 0.0
    %v429 = vld [vmem:[#allocation11] sm:$0xff]
    %v430 = vld [vmem:[#allocation11 + $0x8] sm:$0xff]
    %v431 = vld [vmem:[#allocation11 + $0x10] sm:$0xff]
    %v432 = vld [vmem:[#allocation11 + $0x18] sm:$0xff]
    %v433 = vld [vmem:[#allocation11 + $0x20] sm:$0xff]
    %v434 = vld [vmem:[#allocation11 + $0x28] sm:$0xff]
    %v435 = vld [vmem:[#allocation11 + $0x30] sm:$0xff]
    %v436 = vld [vmem:[#allocation11 + $0x38] sm:$0xff]
    %v437 = vld [vmem:[#allocation11 + $0x40] sm:$0xff]
    %v438 = vld [vmem:[#allocation11 + $0x48] sm:$0xff]
    %v439 = vld [vmem:[#allocation11 + $0x50] sm:$0xff]
    %v440 = vld [vmem:[#allocation11 + $0x58] sm:$0xff]
    %v441 = vld [vmem:[#allocation11 + $0x60] sm:$0xff]
    %v442 = vld [vmem:[#allocation11 + $0x68] sm:$0xff]
    %v443 = vld [vmem:[#allocation11 + $0x70] sm:$0xff]
    %v444 = vld [vmem:[#allocation11 + $0x78] sm:$0xff]
    %445 = vmatprep.subr.mxu0 0.0
    %446 = vmatpush1.msra.mxu0 %v429
    %447 = vmatprep.subr.mxu0 0.0
    %448 = vmatpush1.msra.mxu0 %v430
    %449 = vmatprep.subr.mxu0 0.0
    %450 = vmatpush1.msra.mxu0 %v431
    %451 = vmatprep.subr.mxu0 0.0
    %452 = vmatpush1.msra.mxu0 %v432
    %453 = vmatprep.subr.mxu0 0.0
    %454 = vmatpush1.msra.mxu0 %v433
    %455 = vmatprep.subr.mxu0 0.0
    %456 = vmatpush1.msra.mxu0 %v434
    %457 = vmatprep.subr.mxu0 0.0
    %458 = vmatpush1.msra.mxu0 %v435
    %459 = vmatprep.subr.mxu0 0.0
    %460 = vmatpush1.msra.mxu0 %v436
    %461 = vmatprep.subr.mxu0 0.0
    %462 = vmatpush1.msra.mxu0 %v437
    %463 = vmatprep.subr.mxu0 0.0
    %464 = vmatpush1.msra.mxu0 %v438
    %465 = vmatprep.subr.mxu0 0.0
    %466 = vmatpush1.msra.mxu0 %v439
    %467 = vmatprep.subr.mxu0 0.0
    %468 = vmatpush1.msra.mxu0 %v440
    %469 = vmatprep.subr.mxu0 0.0
    %470 = vmatpush1.msra.mxu0 %v441
    %471 = vmatprep.subr.mxu0 0.0
    %472 = vmatpush1.msra.mxu0 %v442
    %473 = vmatprep.subr.mxu0 0.0
    %474 = vmatpush1.msra.mxu0 %v443
    %475 = vmatprep.subr.mxu0 0.0
    %476 = vmatpush1.msra.mxu0 %v444
    %477 = vmatprep.subr.mxu0 0.0
    %478 = vmatpush1.msra.mxu0 0.0
    %479 = vmatprep.subr.mxu0 0.0
    %480 = vmatpush1.msra.mxu0 0.0
    %481 = vmatprep.subr.mxu0 0.0
    %482 = vmatpush1.msra.mxu0 0.0
    %483 = vmatprep.subr.mxu0 0.0
    %484 = vmatpush1.msra.mxu0 0.0
    %485 = vmatprep.subr.mxu0 0.0
    %486 = vmatpush1.msra.mxu0 0.0
    %487 = vmatprep.subr.mxu0 0.0
    %488 = vmatpush1.msra.mxu0 0.0
    %489 = vmatprep.subr.mxu0 0.0
    %490 = vmatpush1.msra.mxu0 0.0
    %491 = vmatprep.subr.mxu0 0.0
    %492 = vmatpush1.msra.mxu0 0.0
    %493 = vmatprep.subr.mxu0 0.0
    %494 = vmatpush1.msra.mxu0 0.0
    %495 = vmatprep.subr.mxu0 0.0
    %496 = vmatpush1.msra.mxu0 0.0
    %497 = vmatprep.subr.mxu0 0.0
    %498 = vmatpush1.msra.mxu0 0.0
    %499 = vmatprep.subr.mxu0 0.0
    %500 = vmatpush1.msra.mxu0 0.0
    %501 = vmatprep.subr.mxu0 0.0
    %502 = vmatpush1.msra.mxu0 0.0
    %503 = vmatprep.subr.mxu0 0.0
    %504 = vmatpush1.msra.mxu0 0.0
    %505 = vmatprep.subr.mxu0 0.0
    %506 = vmatpush1.msra.mxu0 0.0
    %507 = vmatprep.subr.mxu0 0.0
    %508 = vmatpush1.msra.mxu0 0.0
    %509 = vmatprep.mubr.f32.mxu0 0.0
    %510 = vmatmul.mubr.f32.gmra.mrb[0].mxu0 %v428
    %v511 = vpop.f32.mrb[0].mxu0
    %v512 = vadd.f32 %v191, %v511
    %v513 = vpop.f32.mrb[0].mxu0
    %514 = vdwg.mxu0
    %v515 = vld [vmem:[%s6] sm:$0x1]
    %v517 = vlaneseq
    %v518 = vshrl.u32 %v517, 7
    %v519 = vsub.s32 0, %v518
    %v520 = vrot.slane %v515, %v519
    %v522 = vadd.f32 %v512, %v520
    %523 = vst [vmem:[#allocation13] sm:$0xff] %v522
    // Predicated region
    $region70: #{tpu_custom_call.1} parent=1 // pred_check
      _
    $region71: #{tpu_custom_call.1} parent=1 // pred_check_branch
      %525 = sbr.rel (0) target = $region73
    $region72: #{tpu_custom_call.1} parent=1 // pred_region
      %s527 = ssub.s32 128, 128
      %528 = vsyncadd [#allocation4], %s527
      %s530 = sshll.u32 [#allocation13], 4
      %s531 = int_to_ptr.vmem [resolvable:$true] %s530
      %533 = dma.vmem_to_hbm [thread:$0]  %s531, 128, %s11, [#allocation4]
    $region73: #{tpu_custom_call.1} parent=1 // pred_fallthru
      _
    // Predicated region
    $region74: #{tpu_custom_call.1} parent=1 // pred_check
      _
    $region75: #{tpu_custom_call.1} parent=1 // pred_check_branch
      %535 = sbr.rel (0) target = $region77
    $region76: #{tpu_custom_call.1} parent=1 // pred_region
      %536 = dma.done [#allocation4], 128
    $region77: #{tpu_custom_call.1} parent=1 // pred_fallthru
      _
    %537 = vsyncpa [#allocation3], 1
    %538 = vsyncpa [#allocation6], 1
    %539 = vsyncpa [#allocation9], 1
    %540 = vsyncpa [#allocation12], 1
    %541 = vsyncpa [#allocation4], 1

</llo_original>
